<compile_context>
chip_gen: v5e
topology: v5e:2x2
jax: 0.10.0
libtpu: 0.0.40
codegen_flags: <defaults>
</compile_context>

<pallas_src>
import jax
import jax.numpy as jnp
from jax.experimental import pallas as pl
from jax.experimental.pallas import tpu as pltpu

_LANE = 128
_SUBLANE = 8
# 4096 rows x 128 lanes x 4 B = 2 MiB per f32 tile; with double-buffered
# input + (aliased) output this stays well under every generation's scoped
# VMEM default while amortizing the ~0.35 us per-grid-step overhead.
_ROW_TILE_CAP = 4096
_VMEM_LIMIT_BYTES = 32 * 1024 * 1024


def _copy_kernel(x_ref, o_ref):
    # Pure passthrough of the current (row_tile, cols) VMEM tile.
    o_ref[...] = x_ref[...]


def dummy_phi_forward(x, *, row_tile=None):
    """Identity forward of DummyPhi, executed through a Pallas TPU kernel.

    Accepts any shape; returns an array equal to x (same shape/dtype).
    """
    orig_shape = x.shape
    n = x.size
    if n == 0:
        return x

    # Lane-dense 2-D slab: (rows, 128) whenever possible so the copy hits the
    # HBM roofline instead of the masked-store ceiling.
    if n % _LANE == 0:
        x2 = x.reshape(n // _LANE, _LANE)
    elif x.ndim >= 2:
        x2 = x.reshape(-1, orig_shape[-1])
    else:
        x2 = x.reshape(1, n)
    rows, cols = x2.shape

    # Row tiling: full array when small; otherwise a multiple-of-8 row tile
    # capped for VMEM. Non-full blocks must satisfy the (8, 128) tiling rule,
    # so round user-supplied tiles instead of failing to lower.
    if row_tile is None:
        row_tile = min(rows, _ROW_TILE_CAP)
    row_tile = min(int(row_tile), rows)
    if row_tile != rows:
        row_tile = max(_SUBLANE, (row_tile // _SUBLANE) * _SUBLANE)

    grid = (pl.cdiv(rows, row_tile),)

    out2 = pl.pallas_call(
        _copy_kernel,
        out_shape=jax.ShapeDtypeStruct((rows, cols), x2.dtype),
        grid=grid,
        in_specs=[pl.BlockSpec((row_tile, cols), lambda i: (i, 0))],
        out_specs=pl.BlockSpec((row_tile, cols), lambda i: (i, 0)),
        # Identity op: let the output alias the input buffer (no redundant
        # HBM output allocation; writeback lands on the same pages).
        input_output_aliases={0: 0},
        compiler_params=pltpu.CompilerParams(
            dimension_semantics=("parallel",),
            vmem_limit_bytes=_VMEM_LIMIT_BYTES,
        ),
    )(x2)

    return out2.reshape(orig_shape)


class DummyPhiJax:
    """JAX port of DummyPhi: deterministic params + Pallas identity forward."""

    def __init__(self, features: int):
        self.w = jnp.ones((features,), dtype=jnp.float32)
        self.b = -jnp.ones((features,), dtype=jnp.float32) * 0.5
        self.entropy = None

    @property
    def t(self):
        return -self.b / self.w  # == 0.5 everywhere

    def __call__(self, x):
        # Forward is the exact identity; routed through the Pallas kernel to
        # match the module's forward with TPU execution. (Returning `x`
        # directly would be the true zero-cost path.)
        return dummy_phi_forward(x)


if __name__ == "__main__":
    key = jax.random.PRNGKey(0)
    batch, features = 8, 32  # small shapes consistent with the module
    x = jax.random.normal(key, (batch, features), dtype=jnp.float32)

    phi = DummyPhiJax(features)
    y = jax.block_until_ready(phi(x))

    # Correctness: forward is the exact identity; t == 0.5.
    assert y.shape == x.shape and y.dtype == x.dtype
    assert bool(jnp.all(y == x))
    assert bool(jnp.allclose(phi.t, 0.5))

    # Exercise the non-128-divisible fallback path (full-array block).
    x_small = jax.random.normal(jax.random.PRNGKey(1), (3, 5), dtype=jnp.float32)
    y_small = jax.block_until_ready(dummy_phi_forward(x_small))
    assert y_small.shape == x_small.shape and bool(jnp.all(y_small == x_small))

    print("KERNEL_OK")
</pallas_src>

<mosaic_0001>
module attributes {stable_mosaic.version = 11 : i64} {
  func.func @_copy_kernel(%arg0: i32, %arg1: memref<2x128xf32, #tpu.memory_space<vmem>>, %arg2: memref<2x128xf32, #tpu.memory_space<vmem>>) attributes {dimension_semantics = [#tpu.dimension_semantics<parallel>], iteration_bounds = array<i64: 1>, scalar_prefetch = 0 : i64, scratch_operands = 0 : i64, tpu.core_type = #tpu.core_type<tc>, window_params = [{transform_indices = @transform_0, window_bounds = array<i64: 2, 128>}, {transform_indices = @transform_1, window_bounds = array<i64: 2, 128>}]} {
    %c0 = arith.constant 0 : index
    %c0_0 = arith.constant 0 : index
    %0 = vector.load %arg1[%c0, %c0_0] : memref<2x128xf32, #tpu.memory_space<vmem>>, vector<2x128xf32>
    %c0_1 = arith.constant 0 : index
    %c0_2 = arith.constant 0 : index
    %1 = vector.load %arg2[%c0_1, %c0_2] : memref<2x128xf32, #tpu.memory_space<vmem>>, vector<2x128xf32>
    tpu.vector_store %arg2[%c0_1, %c0_2], %0 {strides = array<i32>} : memref<2x128xf32, #tpu.memory_space<vmem>>, vector<2x128xf32>,
    return
  }
  func.func @transform_0(%arg0: i32) -> (i32, i32) {
    %c0_i32 = arith.constant 0 : i32
    %c0_i32_0 = arith.constant 0 : i32
    return %arg0, %c0_i32 : i32, i32
  }
  func.func @transform_1(%arg0: i32) -> (i32, i32) {
    %c0_i32 = arith.constant 0 : i32
    %c0_i32_0 = arith.constant 0 : i32
    return %arg0, %c0_i32 : i32, i32
  }
}

</mosaic_0001>

<llo_original>
// kernel: tpu_custom_call.1
$region0: #{tpu_custom_call.1}
  #allocation0 [shape = 'u32[]', space=smem, size = 0x4, offset = 0x4, fixed_abs, tag = 'smem constant byte address 0x4 - core index']
  #allocation1 [shape = 'u32[72,128]{1,0:T(1,128)}', space=vmem, size = 0x9000, scoped, tag = 'internal scratch']
  %s0 = inlined_call_operand.hbm [shape: f32[2,128], index: 0, kind: input, shape index: {}, may-alias: {0,1}]
  %s1 = inlined_call_operand.hbm [shape: f32[2,128], index: 1, kind: output, shape index: {}, may-alias: {0,1}]
  %s2 = sld [smem:[#allocation0]]
  $region18: #{tpu_custom_call.1} parent=0
    _
  %s4 = ssub.s32 1, %s2
  %s5 = scalar_select 0, %s4, %s2
  $region1: #{tpu_custom_call.1} parent=0
    #allocation2 [shape = 'u8[1024]{0}', space=vmem, size = 0x400, scoped, tag = 'input window, operand 0, single buffered']
    #allocation3 [shape = 's32[1]{0}', space=sflag, size = 0x4, scoped, tag = 'scoped memory for tpu_custom_call.1']
    #allocation4 [shape = 's32[1]{0}', space=sflag, size = 0x4, scoped, tag = 'scoped memory for tpu_custom_call.1']
    #allocation5 [shape = 'u8[1024]{0}', space=vmem, size = 0x400, scoped, tag = 'output window, operand 0, single buffered']
    %6 = vsyncpa [#allocation3], 0
    %7 = vsyncpa [#allocation4], 0
    // Predicated region
    $region2: #{tpu_custom_call.1} parent=1 // pred_check
      _
    $region3: #{tpu_custom_call.1} parent=1 // pred_check_branch
      %9 = sbr.rel (0) target = $region5
    $region4: #{tpu_custom_call.1} parent=1 // pred_region
      %11 = vsyncadd [#allocation3], 0
      %s13 = sshll.u32 %s0, 4
      %s14 = int_to_ptr.hbm [resolvable:$true] %s13
      %s15 = sshll.u32 [#allocation2], 4
      %s16 = int_to_ptr.vmem [resolvable:$true] %s15
      %18 = dma.hbm_to_vmem [thread:$0]  %s14, 32, %s16, [#allocation3]
    $region5: #{tpu_custom_call.1} parent=1 // pred_fallthru
      _
    // Predicated region
    $region6: #{tpu_custom_call.1} parent=1 // pred_check
      _
    $region7: #{tpu_custom_call.1} parent=1 // pred_check_branch
      %20 = sbr.rel (0) target = $region9
    $region8: #{tpu_custom_call.1} parent=1 // pred_region
      %22 = dma.done [#allocation3], 32
    $region9: #{tpu_custom_call.1} parent=1 // pred_fallthru
      _
    %v23 = vld [vmem:[#allocation2] sm:$0x3]
    %24 = vst [vmem:[#allocation5] sm:$0x3] %v23
    // Predicated region
    $region10: #{tpu_custom_call.1} parent=1 // pred_check
      _
    $region11: #{tpu_custom_call.1} parent=1 // pred_check_branch
      %26 = sbr.rel (0) target = $region13
    $region12: #{tpu_custom_call.1} parent=1 // pred_region
      %28 = vsyncadd [#allocation4], 0
      %s30 = sshll.u32 [#allocation5], 4
      %s31 = int_to_ptr.vmem [resolvable:$true] %s30
      %s32 = sshll.u32 %s1, 4
      %s33 = int_to_ptr.hbm [resolvable:$true] %s32
      %35 = dma.vmem_to_hbm [thread:$0]  %s31, 32, %s33, [#allocation4]
    $region13: #{tpu_custom_call.1} parent=1 // pred_fallthru
      _
    // Predicated region
    $region14: #{tpu_custom_call.1} parent=1 // pred_check
      _
    $region15: #{tpu_custom_call.1} parent=1 // pred_check_branch
      %37 = sbr.rel (0) target = $region17
    $region16: #{tpu_custom_call.1} parent=1 // pred_region
      %39 = dma.done [#allocation4], 32
    $region17: #{tpu_custom_call.1} parent=1 // pred_fallthru
      _
    %40 = vsyncpa [#allocation3], 1
    %41 = vsyncpa [#allocation4], 1

</llo_original>
